<compile_context>
chip_gen: v7x
topology: tpu7x:2x2x1
jax: 0.10.0
libtpu: 0.0.40
codegen_flags: <defaults>
</compile_context>

<pallas_src>
import functools

import numpy as np
import jax
import jax.numpy as jnp
from jax import lax
from jax.experimental import pallas as pl
from jax.experimental.pallas import tpu as pltpu


def _round_up(x, m):
    return (x + m - 1) // m * m


# --------------------------------------------------------------------------
# Pallas kernels
# --------------------------------------------------------------------------
def _conv_stats_kernel(p_ref, w_ref, y_ref, psum_ref, pssq_ref):
    """F frames per step: conv-as-matmul (bf16 in, f32 acc) + per-step partial
    BN batch statistics (sum / sum-of-squares over this step's rows)."""
    F, HoWo, Kp = p_ref.shape
    Cp = w_ref.shape[1]
    p = p_ref[...].reshape(F * HoWo, Kp)          # merge leading dims (layout-free)
    y = jnp.dot(p, w_ref[...], preferred_element_type=jnp.float32)
    y_ref[...] = y.reshape(F, HoWo, Cp)
    s = jnp.sum(y, axis=0, keepdims=True)          # (1, Cp)
    ss = jnp.sum(y * y, axis=0, keepdims=True)     # (1, Cp)
    # Broadcast to (8, Cp) so the stat store block stays (8, 128)-aligned.
    psum_ref[...] = jnp.broadcast_to(s, psum_ref.shape)
    pssq_ref[...] = jnp.broadcast_to(ss, pssq_ref.shape)


def _bn_relu_kernel(y_ref, sc_ref, sh_ref, o_ref):
    """Elementwise BN affine (precomputed scale/shift) + ReLU."""
    o_ref[...] = jnp.maximum(y_ref[...] * sc_ref[...] + sh_ref[...], 0.0)


def _bn_relu_pool_kernel(y_ref, sc_ref, sh_ref, o_ref, z_ref, *, Ho, Wo, Hp, Wp):
    """Fused BN(affine) + ReLU + MaxPool(k=3, s=2, p=1 in H/W) for F frames.

    The BN+ReLU frame is written to a VMEM scratch of shape (F, Ho, Wo+2, Cp)
    with zeroed W-halo columns (post-ReLU values are >= 0, so 0 is a neutral
    element for max).  The decimated output is built directly with
    sublane-strided loads (stride 2 along W) over a static loop on output rows,
    so only the (Hp, Wp) pooled map ever hits HBM.
    """
    F, HoWo, Cp = y_ref.shape
    z = jnp.maximum(y_ref[...] * sc_ref[...] + sh_ref[...], 0.0)   # (F, HoWo, Cp)

    zero_col = jnp.zeros((F, Ho, 1, Cp), jnp.float32)
    z_ref[:, :, 0:1, :] = zero_col                      # left halo
    z_ref[:, :, Wo + 1:Wo + 2, :] = zero_col            # right halo
    z_ref[:, :, 1:Wo + 1, :] = z.reshape(F, Ho, Wo, Cp)

    for ho in range(Hp):
        acc = None
        for dh in (-1, 0, 1):
            r = 2 * ho + dh                 # input row index (no H halo needed)
            if r < 0 or r >= Ho:
                continue                    # statically-known out-of-range row
            for dw in range(3):
                # scratch cols dw + 2*wo, wo in [0, Wp) -> input cols 2*wo-1+dw
                v = z_ref[:, r:r + 1, pl.ds(dw, Wp, stride=2), :]   # (F,1,Wp,Cp)
                acc = v if acc is None else jnp.maximum(acc, v)
        o_ref[:, ho:ho + 1, :, :] = acc


# --------------------------------------------------------------------------
# Pallas wrappers
# --------------------------------------------------------------------------
_VMEM_LIMIT = 64 * 1024 * 1024
_VMEM_BUDGET = 28 * 1024 * 1024


def _choose_frames(NT, HoWo, Kp, Cp, Ho, Wo):
    """Largest F dividing NT such that per-step buffers fit the VMEM budget."""
    Hp = (Ho - 1) // 2 + 1
    Wp = (Wo - 1) // 2 + 1

    def cost(F):
        conv = (2 * F * HoWo * Kp * 2          # patches bf16, double buffered
                + 2 * Kp * Cp * 2              # weights bf16
                + 2 * F * HoWo * Cp * 4)       # conv out f32
        pool = (2 * F * HoWo * Cp * 4          # conv out in
                + F * Ho * (Wo + 2) * Cp * 4   # scratch
                + 2 * F * Hp * Wp * Cp * 4)    # pooled out
        return max(conv, pool)

    best = 1
    for F in range(1, NT + 1):
        if NT % F == 0 and cost(F) <= _VMEM_BUDGET:
            best = F
    return best


def conv_with_stats(patches, w2, F):
    """patches: (NT, HoWo, Kp) bf16, w2: (Kp, Cp) bf16 ->
       y: (NT, HoWo, Cp) f32, per-step partial sum/ssq: (NS, 8, Cp) f32."""
    NT, HoWo, Kp = patches.shape
    Cp = w2.shape[1]
    NS = NT // F
    return pl.pallas_call(
        _conv_stats_kernel,
        out_shape=(jax.ShapeDtypeStruct((NT, HoWo, Cp), jnp.float32),
                   jax.ShapeDtypeStruct((NS, 8, Cp), jnp.float32),
                   jax.ShapeDtypeStruct((NS, 8, Cp), jnp.float32)),
        grid_spec=pltpu.PrefetchScalarGridSpec(
            num_scalar_prefetch=0,
            grid=(NS,),
            in_specs=[pl.BlockSpec((F, HoWo, Kp), lambda g: (g, 0, 0)),
                      pl.BlockSpec((Kp, Cp), lambda g: (0, 0))],
            out_specs=[pl.BlockSpec((F, HoWo, Cp), lambda g: (g, 0, 0)),
                       pl.BlockSpec((None, 8, Cp), lambda g: (g, 0, 0)),
                       pl.BlockSpec((None, 8, Cp), lambda g: (g, 0, 0))]),
        compiler_params=pltpu.CompilerParams(
            dimension_semantics=("parallel",),
            vmem_limit_bytes=_VMEM_LIMIT),
    )(patches, w2)


def bn_relu(y, scale2, shift2, F):
    NT, HoWo, Cp = y.shape
    NS = NT // F
    return pl.pallas_call(
        _bn_relu_kernel,
        out_shape=jax.ShapeDtypeStruct((NT, HoWo, Cp), jnp.float32),
        grid_spec=pltpu.PrefetchScalarGridSpec(
            num_scalar_prefetch=0,
            grid=(NS,),
            in_specs=[pl.BlockSpec((F, HoWo, Cp), lambda g: (g, 0, 0)),
                      pl.BlockSpec((1, Cp), lambda g: (0, 0)),
                      pl.BlockSpec((1, Cp), lambda g: (0, 0))],
            out_specs=pl.BlockSpec((F, HoWo, Cp), lambda g: (g, 0, 0))),
        compiler_params=pltpu.CompilerParams(
            dimension_semantics=("parallel",),
            vmem_limit_bytes=_VMEM_LIMIT),
    )(y, scale2, shift2)


def bn_relu_pool(y, scale2, shift2, F, *, Ho, Wo):
    """Fused BN+ReLU+MaxPool(3x3/s2/p1); returns the decimated (NT,Hp,Wp,Cp) map."""
    NT, HoWo, Cp = y.shape
    NS = NT // F
    Hp = (Ho - 1) // 2 + 1
    Wp = (Wo - 1) // 2 + 1
    kern = functools.partial(_bn_relu_pool_kernel, Ho=Ho, Wo=Wo, Hp=Hp, Wp=Wp)
    return pl.pallas_call(
        kern,
        out_shape=jax.ShapeDtypeStruct((NT, Hp, Wp, Cp), jnp.float32),
        grid_spec=pltpu.PrefetchScalarGridSpec(
            num_scalar_prefetch=0,
            grid=(NS,),
            in_specs=[pl.BlockSpec((F, HoWo, Cp), lambda g: (g, 0, 0)),
                      pl.BlockSpec((1, Cp), lambda g: (0, 0)),
                      pl.BlockSpec((1, Cp), lambda g: (0, 0))],
            out_specs=pl.BlockSpec((F, Hp, Wp, Cp), lambda g: (g, 0, 0, 0)),
            scratch_shapes=[pltpu.VMEM((F, Ho, Wo + 2, Cp), jnp.float32)]),
        compiler_params=pltpu.CompilerParams(
            dimension_semantics=("parallel",),
            vmem_limit_bytes=_VMEM_LIMIT),
    )(y, scale2, shift2)


# --------------------------------------------------------------------------
# Stem (single pathway / multi pathway)
# --------------------------------------------------------------------------
def _im2col(x_ncdhw, kernel, stride, padding):
    """im2col in plain JAX: returns (N*To, Ho*Wo, K) patches."""
    # TODO(synk): the materialized im2col buffer is kT*kH*kW x the input; a
    # direct per-tap accumulating conv kernel would remove this HBM round trip.
    N, Cin, T, H, W = x_ncdhw.shape
    kT, kH, kW = kernel
    sT, sH, sW = stride
    pT, pH, pW = padding
    x = jnp.transpose(x_ncdhw, (0, 2, 3, 4, 1))                      # NTHWC
    x = jnp.pad(x, ((0, 0), (pT, pT), (pH, pH), (pW, pW), (0, 0)))
    Tp, Hp, Wp = x.shape[1], x.shape[2], x.shape[3]
    To = (Tp - kT) // sT + 1
    Ho = (Hp - kH) // sH + 1
    Wo = (Wp - kW) // sW + 1
    views = []
    for kt in range(kT):
        for kh in range(kH):
            for kw in range(kW):
                views.append(x[:, kt:kt + sT * (To - 1) + 1:sT,
                                  kh:kh + sH * (Ho - 1) + 1:sH,
                                  kw:kw + sW * (Wo - 1) + 1:sW, :])
    patches = jnp.stack(views, axis=-2)            # (N, To, Ho, Wo, taps, Cin)
    K = kT * kH * kW * Cin
    patches = patches.reshape(N * To, Ho * Wo, K)
    return patches, To, Ho, Wo, K


def stem_single_pathway(x_ncdhw, w, gamma, beta, kernel, stride, padding,
                        maxpool, bn_eps=1e-5):
    """
    x_ncdhw : (N, Cin, T, H, W) float32
    w       : (kT, kH, kW, Cin, Cout) float32 (equiv. torch (Cout,Cin,kT,kH,kW))
    gamma/beta : (Cout,) BN affine params
    Returns (N, Cout, T', H', W') float32 -- the PyTorch stem forward (train mode).
    """
    N, Cin, T, H, W = x_ncdhw.shape
    Cout = w.shape[-1]

    patches, To, Ho, Wo, K = _im2col(x_ncdhw, kernel, stride, padding)
    NT = N * To
    HoWo = Ho * Wo

    Kp = _round_up(K, 128)
    Cp = _round_up(Cout, 128)
    patches = jnp.pad(patches, ((0, 0), (0, 0), (0, Kp - K))).astype(jnp.bfloat16)
    w2 = jnp.pad(w.reshape(K, Cout),
                 ((0, Kp - K), (0, Cp - Cout))).astype(jnp.bfloat16)

    F = _choose_frames(NT, HoWo, Kp, Cp, Ho, Wo)

    # -- conv as matmul + per-step partial batch stats (Pallas) --
    y, ps, pss = conv_with_stats(patches, w2, F)

    # -- BN batch statistics (train-mode, biased variance) in plain JAX --
    m_true = NT * HoWo
    sum_c = jnp.sum(ps[:, 0, :], axis=0)
    ssq_c = jnp.sum(pss[:, 0, :], axis=0)
    mean = sum_c / m_true
    var = ssq_c / m_true - mean * mean
    gpad = jnp.pad(gamma, (0, Cp - Cout), constant_values=1.0)
    bpad = jnp.pad(beta, (0, Cp - Cout))
    inv = lax.rsqrt(var + bn_eps)
    scale = gpad * inv
    shift = bpad - mean * scale
    scale2 = scale.reshape(1, Cp).astype(jnp.float32)
    shift2 = shift.reshape(1, Cp).astype(jnp.float32)
    # TODO(synk): BatchNorm running_mean/running_var momentum buffer updates
    # are training-time state mutation and are not materialized here.

    if maxpool:
        # MaxPool3d kernel=[1,3,3], stride=[1,2,2], padding=[0,1,1], decimated in-kernel.
        Hpo = (Ho - 1) // 2 + 1
        Wpo = (Wo - 1) // 2 + 1
        pooled = bn_relu_pool(y, scale2, shift2, F, Ho=Ho, Wo=Wo)
        out = pooled.reshape(N, To, Hpo, Wpo, Cp)[..., :Cout]
    else:
        z = bn_relu(y, scale2, shift2, F)
        out = z.reshape(N, To, Ho, Wo, Cp)[..., :Cout]

    return jnp.transpose(out, (0, 4, 1, 2, 3))                       # NCDHW


def stem_multi_pathway(xs, params, kernel, stride, padding, maxpool, bn_eps=1e-5):
    """Equivalent of ResNeXt3DStemMultiPathway.forward: per-pathway stem."""
    assert len(xs) == len(params) == len(kernel) == len(stride) == len(padding) == len(maxpool)
    outs = []
    for p in range(len(xs)):
        w, gamma, beta = params[p]
        outs.append(stem_single_pathway(xs[p], w, gamma, beta,
                                        kernel[p], stride[p], padding[p],
                                        maxpool[p], bn_eps=bn_eps))
    return outs


# --------------------------------------------------------------------------
# Pure-JAX reference (for correctness check)
# --------------------------------------------------------------------------
def stem_reference(x, w, gamma, beta, kernel, stride, padding, maxpool, bn_eps=1e-5):
    w_oidhw = jnp.transpose(w, (4, 3, 0, 1, 2))
    pT, pH, pW = padding
    y = lax.conv_general_dilated(
        x, w_oidhw, window_strides=tuple(stride),
        padding=[(pT, pT), (pH, pH), (pW, pW)],
        dimension_numbers=("NCDHW", "OIDHW", "NCDHW"),
        precision=lax.Precision.HIGHEST)
    mean = jnp.mean(y, axis=(0, 2, 3, 4), keepdims=True)
    var = jnp.mean((y - mean) ** 2, axis=(0, 2, 3, 4), keepdims=True)
    g = gamma.reshape(1, -1, 1, 1, 1)
    b = beta.reshape(1, -1, 1, 1, 1)
    z = jnp.maximum((y - mean) * lax.rsqrt(var + bn_eps) * g + b, 0.0)
    if maxpool:
        z = lax.reduce_window(z, -jnp.inf, lax.max,
                              window_dimensions=(1, 1, 1, 3, 3),
                              window_strides=(1, 1, 1, 2, 2),
                              padding=[(0, 0), (0, 0), (0, 0), (1, 1), (1, 1)])
    return z


# --------------------------------------------------------------------------
if __name__ == "__main__":
    key = jax.random.PRNGKey(0)

    # Two pathways (SlowFast-style), small shapes.
    dim_in = [3, 4]
    dim_out = [8, 16]
    kernel = [[3, 3, 3], [1, 3, 3]]
    stride = [[1, 2, 2], [1, 1, 1]]
    padding = [[1, 1, 1], [0, 1, 1]]
    maxpool = (True, False)
    x_shapes = [(2, 3, 4, 16, 16), (2, 4, 2, 8, 8)]

    keys = jax.random.split(key, 4 * len(dim_in) + 1)
    xs, params = [], []
    for p in range(len(dim_in)):
        kT, kH, kW = kernel[p]
        xs.append(jax.random.normal(keys[4 * p + 0], x_shapes[p], dtype=jnp.float32))
        w = 0.1 * jax.random.normal(keys[4 * p + 1],
                                    (kT, kH, kW, dim_in[p], dim_out[p]),
                                    dtype=jnp.float32)
        gamma = 0.5 + jax.random.uniform(keys[4 * p + 2], (dim_out[p],), dtype=jnp.float32)
        beta = 0.1 * jax.random.normal(keys[4 * p + 3], (dim_out[p],), dtype=jnp.float32)
        params.append((w, gamma, beta))

    outs = stem_multi_pathway(xs, params, kernel, stride, padding, maxpool)
    outs = [jax.block_until_ready(o) for o in outs]

    # Check against pure-JAX reference (conv operands are bf16 in the kernel,
    # hence the slightly looser tolerance).
    for p in range(len(xs)):
        w, gamma, beta = params[p]
        ref = stem_reference(xs[p], w, gamma, beta, kernel[p], stride[p],
                             padding[p], maxpool[p])
        assert outs[p].shape == ref.shape, (outs[p].shape, ref.shape)
        assert jnp.allclose(outs[p], ref, atol=2e-2, rtol=2e-2), (
            f"pathway {p} mismatch: max abs err "
            f"{float(jnp.max(jnp.abs(outs[p] - ref)))}")

    print("KERNEL_OK")
</pallas_src>

<mosaic_0001>
module attributes {stable_mosaic.version = 11 : i64} {
  func.func @_conv_stats_kernel(%arg0: i32, %arg1: memref<8x64x128xbf16, #tpu.memory_space<vmem>>, %arg2: memref<128x128xbf16, #tpu.memory_space<vmem>>, %arg3: memref<8x64x128xf32, #tpu.memory_space<vmem>>, %arg4: memref<1x8x128xf32, #tpu.memory_space<vmem>>, %arg5: memref<1x8x128xf32, #tpu.memory_space<vmem>>) attributes {dimension_semantics = [#tpu.dimension_semantics<parallel>], iteration_bounds = array<i64: 1>, scalar_prefetch = 0 : i64, scratch_operands = 0 : i64, tpu.core_type = #tpu.core_type<tc>, window_params = [{transform_indices = @transform_0, window_bounds = array<i64: 8, 64, 128>}, {pipeline_mode = #tpu.pipeline_mode<synchronous>, transform_indices = @transform_1, window_bounds = array<i64: 128, 128>}, {transform_indices = @transform_2, window_bounds = array<i64: 8, 64, 128>}, {transform_indices = @transform_3, window_bounds = array<i64: 1, 8, 128>}, {transform_indices = @transform_4, window_bounds = array<i64: 1, 8, 128>}]} {
    %c0 = arith.constant 0 : index
    %c0_0 = arith.constant 0 : index
    %c0_1 = arith.constant 0 : index
    %0 = vector.load %arg1[%c0, %c0_0, %c0_1] : memref<8x64x128xbf16, #tpu.memory_space<vmem>>, vector<8x64x128xbf16>
    %1 = vector.shape_cast %0 : vector<8x64x128xbf16> to vector<512x128xbf16>
    %c0_2 = arith.constant 0 : index
    %c0_3 = arith.constant 0 : index
    %2 = vector.load %arg2[%c0_2, %c0_3] : memref<128x128xbf16, #tpu.memory_space<vmem>>, vector<128x128xbf16>
    %cst = arith.constant dense<0.000000e+00> : vector<512x128xf32>
    %3 = tpu.matmul %1, %2, %cst {dimension_numbers = #tpu.dot_dimension_numbers<[1], [0], [0], [1], [0, 0, 1, 1], [], []>} : vector<512x128xbf16>, vector<128x128xbf16>, vector<512x128xf32> -> vector<512x128xf32>
    %4 = vector.shape_cast %3 : vector<512x128xf32> to vector<8x64x128xf32>
    %c0_4 = arith.constant 0 : index
    %c0_5 = arith.constant 0 : index
    %c0_6 = arith.constant 0 : index
    %5 = vector.load %arg3[%c0_4, %c0_5, %c0_6] : memref<8x64x128xf32, #tpu.memory_space<vmem>>, vector<8x64x128xf32>
    tpu.vector_store %arg3[%c0_4, %c0_5, %c0_6], %4 {strides = array<i32>} : memref<8x64x128xf32, #tpu.memory_space<vmem>>, vector<8x64x128xf32>,
    %cst_7 = arith.constant dense<0.000000e+00> : vector<128xf32>
    %6 = vector.multi_reduction <add>, %3, %cst_7 [0] : vector<512x128xf32> to vector<128xf32>
    %7 = vector.shape_cast %6 : vector<128xf32> to vector<1x128xf32>
    %8 = arith.mulf %3, %3 : vector<512x128xf32>
    %cst_8 = arith.constant dense<0.000000e+00> : vector<128xf32>
    %9 = vector.multi_reduction <add>, %8, %cst_8 [0] : vector<512x128xf32> to vector<128xf32>
    %10 = vector.shape_cast %9 : vector<128xf32> to vector<1x128xf32>
    %11 = vector.shape_cast %7 : vector<1x128xf32> to vector<1x128xf32>
    %12 = vector.broadcast %11 : vector<1x128xf32> to vector<8x128xf32>
    %c0_9 = arith.constant 0 : index
    %c0_10 = arith.constant 0 : index
    %c0_11 = arith.constant 0 : index
    %13 = vector.load %arg4[%c0_9, %c0_10, %c0_11] : memref<1x8x128xf32, #tpu.memory_space<vmem>>, vector<1x8x128xf32>
    %14 = vector.shape_cast %13 : vector<1x8x128xf32> to vector<8x128xf32>
    %15 = vector.shape_cast %12 : vector<8x128xf32> to vector<1x8x128xf32>
    tpu.vector_store %arg4[%c0_9, %c0_10, %c0_11], %15 {strides = array<i32>} : memref<1x8x128xf32, #tpu.memory_space<vmem>>, vector<1x8x128xf32>,
    %16 = vector.shape_cast %10 : vector<1x128xf32> to vector<1x128xf32>
    %17 = vector.broadcast %16 : vector<1x128xf32> to vector<8x128xf32>
    %c0_12 = arith.constant 0 : index
    %c0_13 = arith.constant 0 : index
    %c0_14 = arith.constant 0 : index
    %18 = vector.load %arg5[%c0_12, %c0_13, %c0_14] : memref<1x8x128xf32, #tpu.memory_space<vmem>>, vector<1x8x128xf32>
    %19 = vector.shape_cast %18 : vector<1x8x128xf32> to vector<8x128xf32>
    %20 = vector.shape_cast %17 : vector<8x128xf32> to vector<1x8x128xf32>
    tpu.vector_store %arg5[%c0_12, %c0_13, %c0_14], %20 {strides = array<i32>} : memref<1x8x128xf32, #tpu.memory_space<vmem>>, vector<1x8x128xf32>,
    return
  }
  func.func @transform_0(%arg0: i32) -> (i32, i32, i32) {
    %c0_i32 = arith.constant 0 : i32
    %c0_i32_0 = arith.constant 0 : i32
    %c0_i32_1 = arith.constant 0 : i32
    return %arg0, %c0_i32, %c0_i32_0 : i32, i32, i32
  }
  func.func @transform_1(%arg0: i32) -> (i32, i32) {
    %c0_i32 = arith.constant 0 : i32
    %c0_i32_0 = arith.constant 0 : i32
    %c0_i32_1 = arith.constant 0 : i32
    return %c0_i32, %c0_i32_0 : i32, i32
  }
  func.func @transform_2(%arg0: i32) -> (i32, i32, i32) {
    %c0_i32 = arith.constant 0 : i32
    %c0_i32_0 = arith.constant 0 : i32
    %c0_i32_1 = arith.constant 0 : i32
    return %arg0, %c0_i32, %c0_i32_0 : i32, i32, i32
  }
  func.func @transform_3(%arg0: i32) -> (i32, i32, i32) {
    %c0_i32 = arith.constant 0 : i32
    %c0_i32_0 = arith.constant 0 : i32
    %c0_i32_1 = arith.constant 0 : i32
    return %arg0, %c0_i32, %c0_i32_0 : i32, i32, i32
  }
  func.func @transform_4(%arg0: i32) -> (i32, i32, i32) {
    %c0_i32 = arith.constant 0 : i32
    %c0_i32_0 = arith.constant 0 : i32
    %c0_i32_1 = arith.constant 0 : i32
    return %arg0, %c0_i32, %c0_i32_0 : i32, i32, i32
  }
}

</mosaic_0001>

<llo_original>
// kernel: tpu_custom_call.1
$region0: #{tpu_custom_call.1}
  #allocation0 [shape = 'u32[]', space=smem, size = 0x4, offset = 0x4, fixed_abs, tag = 'smem constant byte address 0x4 - core index']
  #allocation1 [shape = 'u32[144,128]{1,0:T(1,128)}', space=vmem, size = 0x12000, scoped, tag = 'internal scratch']
  %s0 = inlined_call_operand.hbm [shape: bf16[8,64,128], index: 0, kind: input, shape index: {}]
  %s1 = inlined_call_operand.hbm [shape: bf16[128,128], index: 1, kind: input, shape index: {}]
  %s2 = inlined_call_operand.hbm [shape: f32[8,64,128], index: 2, kind: output, shape index: {0}]
  %s3 = inlined_call_operand.hbm [shape: f32[1,8,128], index: 3, kind: output, shape index: {1}]
  %s4 = inlined_call_operand.hbm [shape: f32[1,8,128], index: 4, kind: output, shape index: {2}]
  %5 = xla_tuple %s2, %s3, %s4
  %s6 = sld [smem:[#allocation0]]
  $region42: #{tpu_custom_call.1} parent=0
    _
  %s8 = ssub.s32 1, %s6
  %s9 = scalar_select 0, %s8, %s6
  $region1: #{tpu_custom_call.1} parent=0
    #allocation2 [shape = 'u8[131072]{0}', space=vmem, size = 0x20000, scoped, tag = 'input window, operand 0, single buffered']
    #allocation3 [shape = 's32[1]{0}', space=sflag, size = 0x4, scoped, tag = 'scoped memory for tpu_custom_call.1']
    #allocation4 [shape = 's32[1]{0}', space=sflag, size = 0x4, scoped, tag = 'scoped memory for tpu_custom_call.1']
    #allocation5 [shape = 'u8[32768]{0}', space=vmem, size = 0x8000, scoped, tag = 'input window, operand 1, single buffered']
    #allocation6 [shape = 's32[1]{0}', space=sflag, size = 0x4, scoped, tag = 'scoped memory for tpu_custom_call.1']
    #allocation7 [shape = 'u8[262144]{0}', space=vmem, size = 0x40000, scoped, tag = 'output window, operand 0, single buffered']
    #allocation8 [shape = 'u8[4096]{0}', space=vmem, size = 0x1000, scoped, tag = 'output window, operand 1, single buffered']
    #allocation9 [shape = 's32[1]{0}', space=sflag, size = 0x4, scoped, tag = 'scoped memory for tpu_custom_call.1']
    #allocation10 [shape = 'u8[4096]{0}', space=vmem, size = 0x1000, scoped, tag = 'output window, operand 2, single buffered']
    %10 = vsyncpa [#allocation3], 0
    %11 = vsyncpa [#allocation6], 0
    %12 = vsyncpa [#allocation4], 0
    %13 = vsyncpa [#allocation9], 0
    // Predicated region
    $region2: #{tpu_custom_call.1} parent=1 // pred_check
      _
    $region3: #{tpu_custom_call.1} parent=1 // pred_check_branch
      %15 = sbr.rel (0) target = $region5
    $region4: #{tpu_custom_call.1} parent=1 // pred_region
      %s17 = ssub.s32 4096, 4096
      %18 = vsyncadd [#allocation3], %s17
      %s19 = sshll.u32 [#allocation2], 4
      %s20 = int_to_ptr.vmem [resolvable:$true] %s19
      %25 = dma.hbm_to_vmem [thread:$0]  %s0, 4096, %s20, [#allocation3], 64, 64, 4
    $region5: #{tpu_custom_call.1} parent=1 // pred_fallthru
      _
    // Predicated region
    $region6: #{tpu_custom_call.1} parent=1 // pred_check
      _
    $region7: #{tpu_custom_call.1} parent=1 // pred_check_branch
      %27 = sbr.rel (0) target = $region9
    $region8: #{tpu_custom_call.1} parent=1 // pred_region
      %s29 = ssub.s32 1024, 1024
      %30 = vsyncadd [#allocation6], %s29
      %s31 = sshll.u32 [#allocation5], 4
      %s32 = int_to_ptr.vmem [resolvable:$true] %s31
      %37 = dma.hbm_to_vmem [thread:$0]  %s1, 1024, %s32, [#allocation6], 64, 64, 4
    $region9: #{tpu_custom_call.1} parent=1 // pred_fallthru
      _
    // Predicated region
    $region10: #{tpu_custom_call.1} parent=1 // pred_check
      _
    $region11: #{tpu_custom_call.1} parent=1 // pred_check_branch
      %39 = sbr.rel (0) target = $region13
    $region12: #{tpu_custom_call.1} parent=1 // pred_region
      %40 = dma.done [#allocation3], 4096
    $region13: #{tpu_custom_call.1} parent=1 // pred_fallthru
      _
    // Predicated region
    $region14: #{tpu_custom_call.1} parent=1 // pred_check
      _
    $region15: #{tpu_custom_call.1} parent=1 // pred_check_branch
      %42 = sbr.rel (0) target = $region17
    $region16: #{tpu_custom_call.1} parent=1 // pred_region
      %43 = dma.done [#allocation6], 1024
    $region17: #{tpu_custom_call.1} parent=1 // pred_fallthru
      _
    %v45 = vld [vmem:[#allocation2] sm:$0xf]
    %v46 = vld [vmem:[#allocation2 + $0x4] sm:$0xf]
    %v47 = vld [vmem:[#allocation2 + $0x8] sm:$0xf]
    %v48 = vld [vmem:[#allocation2 + $0xc] sm:$0xf]
    %v49 = vld [vmem:[#allocation2 + $0x10] sm:$0xf]
    %v50 = vld [vmem:[#allocation2 + $0x14] sm:$0xf]
    %v51 = vld [vmem:[#allocation2 + $0x18] sm:$0xf]
    %v52 = vld [vmem:[#allocation2 + $0x1c] sm:$0xf]
    %v53 = vld [vmem:[#allocation2 + $0x20] sm:$0xf]
    %v54 = vld [vmem:[#allocation2 + $0x24] sm:$0xf]
    %v55 = vld [vmem:[#allocation2 + $0x28] sm:$0xf]
    %v56 = vld [vmem:[#allocation2 + $0x2c] sm:$0xf]
    %v57 = vld [vmem:[#allocation2 + $0x30] sm:$0xf]
    %v58 = vld [vmem:[#allocation2 + $0x34] sm:$0xf]
    %v59 = vld [vmem:[#allocation2 + $0x38] sm:$0xf]
    %v60 = vld [vmem:[#allocation2 + $0x3c] sm:$0xf]
    %v61 = vld [vmem:[#allocation2 + $0x40] sm:$0xf]
    %v62 = vld [vmem:[#allocation2 + $0x44] sm:$0xf]
    %v63 = vld [vmem:[#allocation2 + $0x48] sm:$0xf]
    %v64 = vld [vmem:[#allocation2 + $0x4c] sm:$0xf]
    %v65 = vld [vmem:[#allocation2 + $0x50] sm:$0xf]
    %v66 = vld [vmem:[#allocation2 + $0x54] sm:$0xf]
    %v67 = vld [vmem:[#allocation2 + $0x58] sm:$0xf]
    %v68 = vld [vmem:[#allocation2 + $0x5c] sm:$0xf]
    %v69 = vld [vmem:[#allocation2 + $0x60] sm:$0xf]
    %v70 = vld [vmem:[#allocation2 + $0x64] sm:$0xf]
    %v71 = vld [vmem:[#allocation2 + $0x68] sm:$0xf]
    %v72 = vld [vmem:[#allocation2 + $0x6c] sm:$0xf]
    %v73 = vld [vmem:[#allocation2 + $0x70] sm:$0xf]
    %v74 = vld [vmem:[#allocation2 + $0x74] sm:$0xf]
    %v75 = vld [vmem:[#allocation2 + $0x78] sm:$0xf]
    %v76 = vld [vmem:[#allocation2 + $0x7c] sm:$0xf]
    %v77 = vld [vmem:[#allocation2 + $0x80] sm:$0xf]
    %v78 = vld [vmem:[#allocation2 + $0x84] sm:$0xf]
    %v79 = vld [vmem:[#allocation2 + $0x88] sm:$0xf]
    %v80 = vld [vmem:[#allocation2 + $0x8c] sm:$0xf]
    %v81 = vld [vmem:[#allocation2 + $0x90] sm:$0xf]
    %v82 = vld [vmem:[#allocation2 + $0x94] sm:$0xf]
    %v83 = vld [vmem:[#allocation2 + $0x98] sm:$0xf]
    %v84 = vld [vmem:[#allocation2 + $0x9c] sm:$0xf]
    %v85 = vld [vmem:[#allocation2 + $0xa0] sm:$0xf]
    %v86 = vld [vmem:[#allocation2 + $0xa4] sm:$0xf]
    %v87 = vld [vmem:[#allocation2 + $0xa8] sm:$0xf]
    %v88 = vld [vmem:[#allocation2 + $0xac] sm:$0xf]
    %v89 = vld [vmem:[#allocation2 + $0xb0] sm:$0xf]
    %v90 = vld [vmem:[#allocation2 + $0xb4] sm:$0xf]
    %v91 = vld [vmem:[#allocation2 + $0xb8] sm:$0xf]
    %v92 = vld [vmem:[#allocation2 + $0xbc] sm:$0xf]
    %v93 = vld [vmem:[#allocation2 + $0xc0] sm:$0xf]
    %v94 = vld [vmem:[#allocation2 + $0xc4] sm:$0xf]
    %v95 = vld [vmem:[#allocation2 + $0xc8] sm:$0xf]
    %v96 = vld [vmem:[#allocation2 + $0xcc] sm:$0xf]
    %v97 = vld [vmem:[#allocation2 + $0xd0] sm:$0xf]
    %v98 = vld [vmem:[#allocation2 + $0xd4] sm:$0xf]
    %v99 = vld [vmem:[#allocation2 + $0xd8] sm:$0xf]
    %v100 = vld [vmem:[#allocation2 + $0xdc] sm:$0xf]
    %v101 = vld [vmem:[#allocation2 + $0xe0] sm:$0xf]
    %v102 = vld [vmem:[#allocation2 + $0xe4] sm:$0xf]
    %v103 = vld [vmem:[#allocation2 + $0xe8] sm:$0xf]
    %v104 = vld [vmem:[#allocation2 + $0xec] sm:$0xf]
    %v105 = vld [vmem:[#allocation2 + $0xf0] sm:$0xf]
    %v106 = vld [vmem:[#allocation2 + $0xf4] sm:$0xf]
    %v107 = vld [vmem:[#allocation2 + $0xf8] sm:$0xf]
    %v108 = vld [vmem:[#allocation2 + $0xfc] sm:$0xf]
    %v109 = vld [vmem:[#allocation5] sm:$0xf]
    %v110 = vld [vmem:[#allocation5 + $0x4] sm:$0xf]
    %v111 = vld [vmem:[#allocation5 + $0x8] sm:$0xf]
    %v112 = vld [vmem:[#allocation5 + $0xc] sm:$0xf]
    %v113 = vld [vmem:[#allocation5 + $0x10] sm:$0xf]
    %v114 = vld [vmem:[#allocation5 + $0x14] sm:$0xf]
    %v115 = vld [vmem:[#allocation5 + $0x18] sm:$0xf]
    %v116 = vld [vmem:[#allocation5 + $0x1c] sm:$0xf]
    %v117 = vld [vmem:[#allocation5 + $0x20] sm:$0xf]
    %v118 = vld [vmem:[#allocation5 + $0x24] sm:$0xf]
    %v119 = vld [vmem:[#allocation5 + $0x28] sm:$0xf]
    %v120 = vld [vmem:[#allocation5 + $0x2c] sm:$0xf]
    %v121 = vld [vmem:[#allocation5 + $0x30] sm:$0xf]
    %v122 = vld [vmem:[#allocation5 + $0x34] sm:$0xf]
    %v123 = vld [vmem:[#allocation5 + $0x38] sm:$0xf]
    %v124 = vld [vmem:[#allocation5 + $0x3c] sm:$0xf]
    %v189 = vunpack.c.l.b16 %v45
    %v190 = vunpack.c.l.b16 %v46
    %v191 = vunpack.c.l.b16 %v47
    %v192 = vunpack.c.l.b16 %v48
    %v193 = vunpack.c.l.b16 %v49
    %v194 = vunpack.c.l.b16 %v50
    %v195 = vunpack.c.l.b16 %v51
    %v196 = vunpack.c.l.b16 %v52
    %v197 = vunpack.c.l.b16 %v53
    %v198 = vunpack.c.l.b16 %v54
    %v199 = vunpack.c.l.b16 %v55
    %v200 = vunpack.c.l.b16 %v56
    %v201 = vunpack.c.l.b16 %v57
    %v202 = vunpack.c.l.b16 %v58
    %v203 = vunpack.c.l.b16 %v59
    %v204 = vunpack.c.l.b16 %v60
    %v205 = vunpack.c.l.b16 %v61
    %v206 = vunpack.c.l.b16 %v62
    %v207 = vunpack.c.l.b16 %v63
    %v208 = vunpack.c.l.b16 %v64
    %v209 = vunpack.c.l.b16 %v65
    %v210 = vunpack.c.l.b16 %v66
    %v211 = vunpack.c.l.b16 %v67
    %v212 = vunpack.c.l.b16 %v68
    %v213 = vunpack.c.l.b16 %v69
    %v214 = vunpack.c.l.b16 %v70
    %v215 = vunpack.c.l.b16 %v71
    %v216 = vunpack.c.l.b16 %v72
    %v217 = vunpack.c.l.b16 %v73
    %v218 = vunpack.c.l.b16 %v74
    %v219 = vunpack.c.l.b16 %v75
    %v220 = vunpack.c.l.b16 %v76
    %v221 = vunpack.c.l.b16 %v77
    %v222 = vunpack.c.l.b16 %v78
    %v223 = vunpack.c.l.b16 %v79
    %v224 = vunpack.c.l.b16 %v80
    %v225 = vunpack.c.l.b16 %v81
    %v226 = vunpack.c.l.b16 %v82
    %v227 = vunpack.c.l.b16 %v83
    %v228 = vunpack.c.l.b16 %v84
    %v229 = vunpack.c.l.b16 %v85
    %v230 = vunpack.c.l.b16 %v86
    %v231 = vunpack.c.l.b16 %v87
    %v232 = vunpack.c.l.b16 %v88
    %v233 = vunpack.c.l.b16 %v89
    %v234 = vunpack.c.l.b16 %v90
    %v235 = vunpack.c.l.b16 %v91
    %v236 = vunpack.c.l.b16 %v92
    %v237 = vunpack.c.l.b16 %v93
    %v238 = vunpack.c.l.b16 %v94
    %v239 = vunpack.c.l.b16 %v95
    %v240 = vunpack.c.l.b16 %v96
    %v241 = vunpack.c.l.b16 %v97
    %v242 = vunpack.c.l.b16 %v98
    %v243 = vunpack.c.l.b16 %v99
    %v244 = vunpack.c.l.b16 %v100
    %v245 = vunpack.c.l.b16 %v101
    %v246 = vunpack.c.l.b16 %v102
    %v247 = vunpack.c.l.b16 %v103
    %v248 = vunpack.c.l.b16 %v104
    %v249 = vunpack.c.l.b16 %v105
    %v250 = vunpack.c.l.b16 %v106
    %v251 = vunpack.c.l.b16 %v107
    %v252 = vunpack.c.l.b16 %v108
    %v253 = vpack.c.b16 %v190, %v189
    %v254 = vpack.c.b16 %v192, %v191
    %v255 = vpack.c.b16 %v194, %v193
    %v256 = vpack.c.b16 %v196, %v195
    %v257 = vpack.c.b16 %v198, %v197
    %v258 = vpack.c.b16 %v200, %v199
    %v259 = vpack.c.b16 %v202, %v201
    %v260 = vpack.c.b16 %v204, %v203
    %v261 = vpack.c.b16 %v206, %v205
    %v262 = vpack.c.b16 %v208, %v207
    %v263 = vpack.c.b16 %v210, %v209
    %v264 = vpack.c.b16 %v212, %v211
    %v265 = vpack.c.b16 %v214, %v213
    %v266 = vpack.c.b16 %v216, %v215
    %v267 = vpack.c.b16 %v218, %v217
    %v268 = vpack.c.b16 %v220, %v219
    %v269 = vpack.c.b16 %v222, %v221
    %v270 = vpack.c.b16 %v224, %v223
    %v271 = vpack.c.b16 %v226, %v225
    %v272 = vpack.c.b16 %v228, %v227
    %v273 = vpack.c.b16 %v230, %v229
    %v274 = vpack.c.b16 %v232, %v231
    %v275 = vpack.c.b16 %v234, %v233
    %v276 = vpack.c.b16 %v236, %v235
    %v277 = vpack.c.b16 %v238, %v237
    %v278 = vpack.c.b16 %v240, %v239
    %v279 = vpack.c.b16 %v242, %v241
    %v280 = vpack.c.b16 %v244, %v243
    %v281 = vpack.c.b16 %v246, %v245
    %v282 = vpack.c.b16 %v248, %v247
    %v283 = vpack.c.b16 %v250, %v249
    %v284 = vpack.c.b16 %v252, %v251
    %v333 = vunpack.c.l.b16 %v109
    %v334 = vunpack.c.l.b16 %v110
    %v335 = vunpack.c.l.b16 %v111
    %v336 = vunpack.c.l.b16 %v112
    %v337 = vunpack.c.l.b16 %v113
    %v338 = vunpack.c.l.b16 %v114
    %v339 = vunpack.c.l.b16 %v115
    %v340 = vunpack.c.l.b16 %v116
    %v341 = vunpack.c.l.b16 %v117
    %v342 = vunpack.c.l.b16 %v118
    %v343 = vunpack.c.l.b16 %v119
    %v344 = vunpack.c.l.b16 %v120
    %v345 = vunpack.c.l.b16 %v121
    %v346 = vunpack.c.l.b16 %v122
    %v347 = vunpack.c.l.b16 %v123
    %v348 = vunpack.c.l.b16 %v124
    %v349 = vpack.c.b16 %v334, %v333
    %v350 = vpack.c.b16 %v336, %v335
    %v351 = vpack.c.b16 %v338, %v337
    %v352 = vpack.c.b16 %v340, %v339
    %v353 = vpack.c.b16 %v342, %v341
    %v354 = vpack.c.b16 %v344, %v343
    %v355 = vpack.c.b16 %v346, %v345
    %v356 = vpack.c.b16 %v348, %v347
    %365 = vmatprep.subr.bf16.mxu0 0
    %366 = vmatpush1.bf16.msra.mxu0 %v349
    %367 = vmatprep.subr.bf16.mxu0 0
    %368 = vmatpush1.bf16.msra.mxu0 %v350
    %369 = vmatprep.subr.bf16.mxu0 0
    %370 = vmatpush1.bf16.msra.mxu0 %v351
    %371 = vmatprep.subr.bf16.mxu0 0
    %372 = vmatpush1.bf16.msra.mxu0 %v352
    %373 = vmatprep.subr.bf16.mxu0 0
    %374 = vmatpush1.bf16.msra.mxu0 %v353
    %375 = vmatprep.subr.bf16.mxu0 0
    %376 = vmatpush1.bf16.msra.mxu0 %v354
    %377 = vmatprep.subr.bf16.mxu0 0
    %378 = vmatpush1.bf16.msra.mxu0 %v355
    %379 = vmatprep.subr.bf16.mxu0 0
    %380 = vmatpush1.bf16.msra.mxu0 %v356
    %381 = vmatprep.subr.bf16.mxu0 0
    %382 = vmatpush1.bf16.msra.mxu0 0
    %383 = vmatprep.subr.bf16.mxu0 0
    %384 = vmatpush1.bf16.msra.mxu0 0
    %385 = vmatprep.subr.bf16.mxu0 0
    %386 = vmatpush1.bf16.msra.mxu0 0
    %387 = vmatprep.subr.bf16.mxu0 0
    %388 = vmatpush1.bf16.msra.mxu0 0
    %389 = vmatprep.subr.bf16.mxu0 0
    %390 = vmatpush1.bf16.msra.mxu0 0
    %391 = vmatprep.subr.bf16.mxu0 0
    %392 = vmatpush1.bf16.msra.mxu0 0
    %393 = vmatprep.subr.bf16.mxu0 0
    %394 = vmatpush1.bf16.msra.mxu0 0
    %395 = vmatprep.subr.bf16.mxu0 0
    %396 = vmatpush1.bf16.msra.mxu0 0
    %397 = vmatprep.mubr.bf16.mxu0 0
    %398 = vmatmul.mubr.bf16.gmra.mrb[0].mxu0 %v253
    %v399 = vpop.f32.mrb[0].mxu0
    %v400 = vadd.f32 0.0, %v399
    %v401 = vpop.f32.mrb[0].mxu0
    %v402 = vpop.f32.mrb[0].mxu0
    %v403 = vadd.f32 0.0, %v402
    %v404 = vpop.f32.mrb[0].mxu0
    %405 = vmatprep.mubr.bf16.mxu0 0
    %406 = vmatmul.mubr.bf16.gmra.mrb[0].mxu0 %v254
    %v407 = vpop.f32.mrb[0].mxu0
    %v408 = vadd.f32 0.0, %v407
    %v409 = vpop.f32.mrb[0].mxu0
    %v410 = vpop.f32.mrb[0].mxu0
    %v411 = vadd.f32 0.0, %v410
    %v412 = vpop.f32.mrb[0].mxu0
    %413 = vmatprep.mubr.bf16.mxu0 0
    %414 = vmatmul.mubr.bf16.gmra.mrb[0].mxu0 %v255
    %v415 = vpop.f32.mrb[0].mxu0
    %v416 = vadd.f32 0.0, %v415
    %v417 = vpop.f32.mrb[0].mxu0
    %v418 = vpop.f32.mrb[0].mxu0
    %v419 = vadd.f32 0.0, %v418
    %v420 = vpop.f32.mrb[0].mxu0
    %421 = vmatprep.mubr.bf16.mxu0 0
    %422 = vmatmul.mubr.bf16.gmra.mrb[0].mxu0 %v256
    %v423 = vpop.f32.mrb[0].mxu0
    %v424 = vadd.f32 0.0, %v423
    %v425 = vpop.f32.mrb[0].mxu0
    %v426 = vpop.f32.mrb[0].mxu0
    %v427 = vadd.f32 0.0, %v426
    %v428 = vpop.f32.mrb[0].mxu0
    %429 = vmatprep.mubr.bf16.mxu0 0
    %430 = vmatmul.mubr.bf16.gmra.mrb[0].mxu0 %v257
    %v431 = vpop.f32.mrb[0].mxu0
    %v432 = vadd.f32 0.0, %v431
    %v433 = vpop.f32.mrb[0].mxu0
    %v434 = vpop.f32.mrb[0].mxu0
    %v435 = vadd.f32 0.0, %v434
    %v436 = vpop.f32.mrb[0].mxu0
    %437 = vmatprep.mubr.bf16.mxu0 0
    %438 = vmatmul.mubr.bf16.gmra.mrb[0].mxu0 %v258
    %v439 = vpop.f32.mrb[0].mxu0
    %v440 = vadd.f32 0.0, %v439
    %v441 = vpop.f32.mrb[0].mxu0
    %v442 = vpop.f32.mrb[0].mxu0
    %v443 = vadd.f32 0.0, %v442
    %v444 = vpop.f32.mrb[0].mxu0
    %445 = vmatprep.mubr.bf16.mxu0 0
    %446 = vmatmul.mubr.bf16.gmra.mrb[0].mxu0 %v259
    %v447 = vpop.f32.mrb[0].mxu0
    %v448 = vadd.f32 0.0, %v447
    %v449 = vpop.f32.mrb[0].mxu0
    %v450 = vpop.f32.mrb[0].mxu0
    %v451 = vadd.f32 0.0, %v450
    %v452 = vpop.f32.mrb[0].mxu0
    %453 = vmatprep.mubr.bf16.mxu0 0
    %454 = vmatmul.mubr.bf16.gmra.mrb[0].mxu0 %v260
    %v455 = vpop.f32.mrb[0].mxu0
    %v456 = vadd.f32 0.0, %v455
    %v457 = vpop.f32.mrb[0].mxu0
    %v458 = vpop.f32.mrb[0].mxu0
    %v459 = vadd.f32 0.0, %v458
    %v460 = vpop.f32.mrb[0].mxu0
    %461 = vmatprep.mubr.bf16.mxu0 0
    %462 = vmatmul.mubr.bf16.gmra.mrb[0].mxu0 %v261
    %v463 = vpop.f32.mrb[0].mxu0
    %v464 = vadd.f32 0.0, %v463
    %v465 = vpop.f32.mrb[0].mxu0
    %v466 = vpop.f32.mrb[0].mxu0
    %v467 = vadd.f32 0.0, %v466
    %v468 = vpop.f32.mrb[0].mxu0
    %469 = vmatprep.mubr.bf16.mxu0 0
    %470 = vmatmul.mubr.bf16.gmra.mrb[0].mxu0 %v262
    %v471 = vpop.f32.mrb[0].mxu0
    %v472 = vadd.f32 0.0, %v471
    %v473 = vpop.f32.mrb[0].mxu0
    %v474 = vpop.f32.mrb[0].mxu0
    %v475 = vadd.f32 0.0, %v474
    %v476 = vpop.f32.mrb[0].mxu0
    %477 = vmatprep.mubr.bf16.mxu0 0
    %478 = vmatmul.mubr.bf16.gmra.mrb[0].mxu0 %v263
    %v479 = vpop.f32.mrb[0].mxu0
    %v480 = vadd.f32 0.0, %v479
    %v481 = vpop.f32.mrb[0].mxu0
    %v482 = vpop.f32.mrb[0].mxu0
    %v483 = vadd.f32 0.0, %v482
    %v484 = vpop.f32.mrb[0].mxu0
    %485 = vmatprep.mubr.bf16.mxu0 0
    %486 = vmatmul.mubr.bf16.gmra.mrb[0].mxu0 %v264
    %v487 = vpop.f32.mrb[0].mxu0
    %v488 = vadd.f32 0.0, %v487
    %v489 = vpop.f32.mrb[0].mxu0
    %v490 = vpop.f32.mrb[0].mxu0
    %v491 = vadd.f32 0.0, %v490
    %v492 = vpop.f32.mrb[0].mxu0
    %493 = vmatprep.mubr.bf16.mxu0 0
    %494 = vmatmul.mubr.bf16.gmra.mrb[0].mxu0 %v265
    %v495 = vpop.f32.mrb[0].mxu0
    %v496 = vadd.f32 0.0, %v495
    %v497 = vpop.f32.mrb[0].mxu0
    %v498 = vpop.f32.mrb[0].mxu0
    %v499 = vadd.f32 0.0, %v498
    %v500 = vpop.f32.mrb[0].mxu0
    %501 = vmatprep.mubr.bf16.mxu0 0
    %502 = vmatmul.mubr.bf16.gmra.mrb[0].mxu0 %v266
    %v503 = vpop.f32.mrb[0].mxu0
    %v504 = vadd.f32 0.0, %v503
    %v505 = vpop.f32.mrb[0].mxu0
    %v506 = vpop.f32.mrb[0].mxu0
    %v507 = vadd.f32 0.0, %v506
    %v508 = vpop.f32.mrb[0].mxu0
    %509 = vmatprep.mubr.bf16.mxu0 0
    %510 = vmatmul.mubr.bf16.gmra.mrb[0].mxu0 %v267
    %v511 = vpop.f32.mrb[0].mxu0
    %v512 = vadd.f32 0.0, %v511
    %v513 = vpop.f32.mrb[0].mxu0
    %v514 = vpop.f32.mrb[0].mxu0
    %v515 = vadd.f32 0.0, %v514
    %v516 = vpop.f32.mrb[0].mxu0
    %517 = vmatprep.mubr.bf16.mxu0 0
    %518 = vmatmul.mubr.bf16.gmra.mrb[0].mxu0 %v268
    %v519 = vpop.f32.mrb[0].mxu0
    %v520 = vadd.f32 0.0, %v519
    %v521 = vpop.f32.mrb[0].mxu0
    %v522 = vpop.f32.mrb[0].mxu0
    %v523 = vadd.f32 0.0, %v522
    %v524 = vpop.f32.mrb[0].mxu0
    %525 = vmatprep.mubr.bf16.mxu0 0
    %526 = vmatmul.mubr.bf16.gmra.mrb[0].mxu0 %v269
    %v527 = vpop.f32.mrb[0].mxu0
    %v528 = vadd.f32 0.0, %v527
    %v529 = vpop.f32.mrb[0].mxu0
    %v530 = vpop.f32.mrb[0].mxu0
    %v531 = vadd.f32 0.0, %v530
    %v532 = vpop.f32.mrb[0].mxu0
    %533 = vmatprep.mubr.bf16.mxu0 0
    %534 = vmatmul.mubr.bf16.gmra.mrb[0].mxu0 %v270
    %v535 = vpop.f32.mrb[0].mxu0
    %v536 = vadd.f32 0.0, %v535
    %v537 = vpop.f32.mrb[0].mxu0
    %v538 = vpop.f32.mrb[0].mxu0
    %v539 = vadd.f32 0.0, %v538
    %v540 = vpop.f32.mrb[0].mxu0
    %541 = vmatprep.mubr.bf16.mxu0 0
    %542 = vmatmul.mubr.bf16.gmra.mrb[0].mxu0 %v271
    %v543 = vpop.f32.mrb[0].mxu0
    %v544 = vadd.f32 0.0, %v543
    %v545 = vpop.f32.mrb[0].mxu0
    %v546 = vpop.f32.mrb[0].mxu0
    %v547 = vadd.f32 0.0, %v546
    %v548 = vpop.f32.mrb[0].mxu0
    %549 = vmatprep.mubr.bf16.mxu0 0
    %550 = vmatmul.mubr.bf16.gmra.mrb[0].mxu0 %v272
    %v551 = vpop.f32.mrb[0].mxu0
    %v552 = vadd.f32 0.0, %v551
    %v553 = vpop.f32.mrb[0].mxu0
    %v554 = vpop.f32.mrb[0].mxu0
    %v555 = vadd.f32 0.0, %v554
    %v556 = vpop.f32.mrb[0].mxu0
    %557 = vmatprep.mubr.bf16.mxu0 0
    %558 = vmatmul.mubr.bf16.gmra.mrb[0].mxu0 %v273
    %v559 = vpop.f32.mrb[0].mxu0
    %v560 = vadd.f32 0.0, %v559
    %v561 = vpop.f32.mrb[0].mxu0
    %v562 = vpop.f32.mrb[0].mxu0
    %v563 = vadd.f32 0.0, %v562
    %v564 = vpop.f32.mrb[0].mxu0
    %565 = vmatprep.mubr.bf16.mxu0 0
    %566 = vmatmul.mubr.bf16.gmra.mrb[0].mxu0 %v274
    %v567 = vpop.f32.mrb[0].mxu0
    %v568 = vadd.f32 0.0, %v567
    %v569 = vpop.f32.mrb[0].mxu0
    %v570 = vpop.f32.mrb[0].mxu0
    %v571 = vadd.f32 0.0, %v570
    %v572 = vpop.f32.mrb[0].mxu0
    %573 = vmatprep.mubr.bf16.mxu0 0
    %574 = vmatmul.mubr.bf16.gmra.mrb[0].mxu0 %v275
    %v575 = vpop.f32.mrb[0].mxu0
    %v576 = vadd.f32 0.0, %v575
    %v577 = vpop.f32.mrb[0].mxu0
    %v578 = vpop.f32.mrb[0].mxu0
    %v579 = vadd.f32 0.0, %v578
    %v580 = vpop.f32.mrb[0].mxu0
    %581 = vmatprep.mubr.bf16.mxu0 0
    %582 = vmatmul.mubr.bf16.gmra.mrb[0].mxu0 %v276
    %v583 = vpop.f32.mrb[0].mxu0
    %v584 = vadd.f32 0.0, %v583
    %v585 = vpop.f32.mrb[0].mxu0
    %v586 = vpop.f32.mrb[0].mxu0
    %v587 = vadd.f32 0.0, %v586
    %v588 = vpop.f32.mrb[0].mxu0
    %589 = vmatprep.mubr.bf16.mxu0 0
    %590 = vmatmul.mubr.bf16.gmra.mrb[0].mxu0 %v277
    %v591 = vpop.f32.mrb[0].mxu0
    %v592 = vadd.f32 0.0, %v591
    %v593 = vpop.f32.mrb[0].mxu0
    %v594 = vpop.f32.mrb[0].mxu0
    %v595 = vadd.f32 0.0, %v594
    %v596 = vpop.f32.mrb[0].mxu0
    %597 = vmatprep.mubr.bf16.mxu0 0
    %598 = vmatmul.mubr.bf16.gmra.mrb[0].mxu0 %v278
    %v599 = vpop.f32.mrb[0].mxu0
    %v600 = vadd.f32 0.0, %v599
    %v601 = vpop.f32.mrb[0].mxu0
    %v602 = vpop.f32.mrb[0].mxu0
    %v603 = vadd.f32 0.0, %v602
    %v604 = vpop.f32.mrb[0].mxu0
    %605 = vmatprep.mubr.bf16.mxu0 0
    %606 = vmatmul.mubr.bf16.gmra.mrb[0].mxu0 %v279
    %v607 = vpop.f32.mrb[0].mxu0
    %v608 = vadd.f32 0.0, %v607
    %v609 = vpop.f32.mrb[0].mxu0
    %v610 = vpop.f32.mrb[0].mxu0
    %v611 = vadd.f32 0.0, %v610
    %v612 = vpop.f32.mrb[0].mxu0
    %613 = vmatprep.mubr.bf16.mxu0 0
    %614 = vmatmul.mubr.bf16.gmra.mrb[0].mxu0 %v280
    %v615 = vpop.f32.mrb[0].mxu0
    %v616 = vadd.f32 0.0, %v615
    %v617 = vpop.f32.mrb[0].mxu0
    %v618 = vpop.f32.mrb[0].mxu0
    %v619 = vadd.f32 0.0, %v618
    %v620 = vpop.f32.mrb[0].mxu0
    %621 = vmatprep.mubr.bf16.mxu0 0
    %622 = vmatmul.mubr.bf16.gmra.mrb[0].mxu0 %v281
    %v623 = vpop.f32.mrb[0].mxu0
    %v624 = vadd.f32 0.0, %v623
    %v625 = vpop.f32.mrb[0].mxu0
    %v626 = vpop.f32.mrb[0].mxu0
    %v627 = vadd.f32 0.0, %v626
    %v628 = vpop.f32.mrb[0].mxu0
    %629 = vmatprep.mubr.bf16.mxu0 0
    %630 = vmatmul.mubr.bf16.gmra.mrb[0].mxu0 %v282
    %v631 = vpop.f32.mrb[0].mxu0
    %v632 = vadd.f32 0.0, %v631
    %v633 = vpop.f32.mrb[0].mxu0
    %v634 = vpop.f32.mrb[0].mxu0
    %v635 = vadd.f32 0.0, %v634
    %v636 = vpop.f32.mrb[0].mxu0
    %637 = vmatprep.mubr.bf16.mxu0 0
    %638 = vmatmul.mubr.bf16.gmra.mrb[0].mxu0 %v283
    %v639 = vpop.f32.mrb[0].mxu0
    %v640 = vadd.f32 0.0, %v639
    %v641 = vpop.f32.mrb[0].mxu0
    %v642 = vpop.f32.mrb[0].mxu0
    %v643 = vadd.f32 0.0, %v642
    %v644 = vpop.f32.mrb[0].mxu0
    %645 = vmatprep.mubr.bf16.mxu0 0
    %646 = vmatmul.mubr.bf16.gmra.mrb[0].mxu0 %v284
    %v647 = vpop.f32.mrb[0].mxu0
    %v648 = vadd.f32 0.0, %v647
    %v649 = vpop.f32.mrb[0].mxu0
    %v650 = vpop.f32.mrb[0].mxu0
    %v651 = vadd.f32 0.0, %v650
    %v652 = vpop.f32.mrb[0].mxu0
    %653 = vdwg.mxu0
    %654 = vst [vmem:[#allocation7] sm:$0xff] %v400
    %655 = vst [vmem:[#allocation7 + $0x8] sm:$0xff] %v403
    %656 = vst [vmem:[#allocation7 + $0x10] sm:$0xff] %v408
    %657 = vst [vmem:[#allocation7 + $0x18] sm:$0xff] %v411
    %658 = vst [vmem:[#allocation7 + $0x20] sm:$0xff] %v416
    %659 = vst [vmem:[#allocation7 + $0x28] sm:$0xff] %v419
    %660 = vst [vmem:[#allocation7 + $0x30] sm:$0xff] %v424
    %661 = vst [vmem:[#allocation7 + $0x38] sm:$0xff] %v427
    %662 = vst [vmem:[#allocation7 + $0x40] sm:$0xff] %v432
    %663 = vst [vmem:[#allocation7 + $0x48] sm:$0xff] %v435
    %664 = vst [vmem:[#allocation7 + $0x50] sm:$0xff] %v440
    %665 = vst [vmem:[#allocation7 + $0x58] sm:$0xff] %v443
    %666 = vst [vmem:[#allocation7 + $0x60] sm:$0xff] %v448
    %667 = vst [vmem:[#allocation7 + $0x68] sm:$0xff] %v451
    %668 = vst [vmem:[#allocation7 + $0x70] sm:$0xff] %v456
    %669 = vst [vmem:[#allocation7 + $0x78] sm:$0xff] %v459
    %670 = vst [vmem:[#allocation7 + $0x80] sm:$0xff] %v464
    %671 = vst [vmem:[#allocation7 + $0x88] sm:$0xff] %v467
    %672 = vst [vmem:[#allocation7 + $0x90] sm:$0xff] %v472
    %673 = vst [vmem:[#allocation7 + $0x98] sm:$0xff] %v475
    %674 = vst [vmem:[#allocation7 + $0xa0] sm:$0xff] %v480
    %675 = vst [vmem:[#allocation7 + $0xa8] sm:$0xff] %v483
    %676 = vst [vmem:[#allocation7 + $0xb0] sm:$0xff] %v488
    %677 = vst [vmem:[#allocation7 + $0xb8] sm:$0xff] %v491
    %678 = vst [vmem:[#allocation7 + $0xc0] sm:$0xff] %v496
    %679 = vst [vmem:[#allocation7 + $0xc8] sm:$0xff] %v499
    %680 = vst [vmem:[#allocation7 + $0xd0] sm:$0xff] %v504
    %681 = vst [vmem:[#allocation7 + $0xd8] sm:$0xff] %v507
    %682 = vst [vmem:[#allocation7 + $0xe0] sm:$0xff] %v512
    %683 = vst [vmem:[#allocation7 + $0xe8] sm:$0xff] %v515
    %684 = vst [vmem:[#allocation7 + $0xf0] sm:$0xff] %v520
    %685 = vst [vmem:[#allocation7 + $0xf8] sm:$0xff] %v523
    %686 = vst [vmem:[#allocation7 + $0x100] sm:$0xff] %v528
    %687 = vst [vmem:[#allocation7 + $0x108] sm:$0xff] %v531
    %688 = vst [vmem:[#allocation7 + $0x110] sm:$0xff] %v536
    %689 = vst [vmem:[#allocation7 + $0x118] sm:$0xff] %v539
    %690 = vst [vmem:[#allocation7 + $0x120] sm:$0xff] %v544
    %691 = vst [vmem:[#allocation7 + $0x128] sm:$0xff] %v547
    %692 = vst [vmem:[#allocation7 + $0x130] sm:$0xff] %v552
    %693 = vst [vmem:[#allocation7 + $0x138] sm:$0xff] %v555
    %694 = vst [vmem:[#allocation7 + $0x140] sm:$0xff] %v560
    %695 = vst [vmem:[#allocation7 + $0x148] sm:$0xff] %v563
    %696 = vst [vmem:[#allocation7 + $0x150] sm:$0xff] %v568
    %697 = vst [vmem:[#allocation7 + $0x158] sm:$0xff] %v571
    %698 = vst [vmem:[#allocation7 + $0x160] sm:$0xff] %v576
    %699 = vst [vmem:[#allocation7 + $0x168] sm:$0xff] %v579
    %700 = vst [vmem:[#allocation7 + $0x170] sm:$0xff] %v584
    %701 = vst [vmem:[#allocation7 + $0x178] sm:$0xff] %v587
    %702 = vst [vmem:[#allocation7 + $0x180] sm:$0xff] %v592
    %703 = vst [vmem:[#allocation7 + $0x188] sm:$0xff] %v595
    %704 = vst [vmem:[#allocation7 + $0x190] sm:$0xff] %v600
    %705 = vst [vmem:[#allocation7 + $0x198] sm:$0xff] %v603
    %706 = vst [vmem:[#allocation7 + $0x1a0] sm:$0xff] %v608
    %707 = vst [vmem:[#allocation7 + $0x1a8] sm:$0xff] %v611
    %708 = vst [vmem:[#allocation7 + $0x1b0] sm:$0xff] %v616
    %709 = vst [vmem:[#allocation7 + $0x1b8] sm:$0xff] %v619
    %710 = vst [vmem:[#allocation7 + $0x1c0] sm:$0xff] %v624
    %711 = vst [vmem:[#allocation7 + $0x1c8] sm:$0xff] %v627
    %712 = vst [vmem:[#allocation7 + $0x1d0] sm:$0xff] %v632
    %713 = vst [vmem:[#allocation7 + $0x1d8] sm:$0xff] %v635
    %714 = vst [vmem:[#allocation7 + $0x1e0] sm:$0xff] %v640
    %715 = vst [vmem:[#allocation7 + $0x1e8] sm:$0xff] %v643
    %716 = vst [vmem:[#allocation7 + $0x1f0] sm:$0xff] %v648
    %717 = vst [vmem:[#allocation7 + $0x1f8] sm:$0xff] %v651
    %v718 = vadd.f32 %v400, %v403
    %v719 = vadd.f32 %v718, %v408
    %v720 = vadd.f32 %v719, %v411
    %v721 = vadd.f32 %v720, %v416
    %v722 = vadd.f32 %v721, %v419
    %v723 = vadd.f32 %v722, %v424
    %v724 = vadd.f32 %v723, %v427
    %v725 = vadd.f32 %v724, %v432
    %v726 = vadd.f32 %v725, %v435
    %v727 = vadd.f32 %v726, %v440
    %v728 = vadd.f32 %v727, %v443
    %v729 = vadd.f32 %v728, %v448
    %v730 = vadd.f32 %v729, %v451
    %v731 = vadd.f32 %v730, %v456
    %v732 = vadd.f32 %v731, %v459
    %v733 = vadd.f32 %v732, %v464
    %v734 = vadd.f32 %v733, %v467
    %v735 = vadd.f32 %v734, %v472
    %v736 = vadd.f32 %v735, %v475
    %v737 = vadd.f32 %v736, %v480
    %v738 = vadd.f32 %v737, %v483
    %v739 = vadd.f32 %v738, %v488
    %v740 = vadd.f32 %v739, %v491
    %v741 = vadd.f32 %v740, %v496
    %v742 = vadd.f32 %v741, %v499
    %v743 = vadd.f32 %v742, %v504
    %v744 = vadd.f32 %v743, %v507
    %v745 = vadd.f32 %v744, %v512
    %v746 = vadd.f32 %v745, %v515
    %v747 = vadd.f32 %v746, %v520
    %v748 = vadd.f32 %v747, %v523
    %v749 = vadd.f32 %v748, %v528
    %v750 = vadd.f32 %v749, %v531
    %v751 = vadd.f32 %v750, %v536
    %v752 = vadd.f32 %v751, %v539
    %v753 = vadd.f32 %v752, %v544
    %v754 = vadd.f32 %v753, %v547
    %v755 = vadd.f32 %v754, %v552
    %v756 = vadd.f32 %v755, %v555
    %v757 = vadd.f32 %v756, %v560
    %v758 = vadd.f32 %v757, %v563
    %v759 = vadd.f32 %v758, %v568
    %v760 = vadd.f32 %v759, %v571
    %v761 = vadd.f32 %v760, %v576
    %v762 = vadd.f32 %v761, %v579
    %v763 = vadd.f32 %v762, %v584
    %v764 = vadd.f32 %v763, %v587
    %v765 = vadd.f32 %v764, %v592
    %v766 = vadd.f32 %v765, %v595
    %v767 = vadd.f32 %v766, %v600
    %v768 = vadd.f32 %v767, %v603
    %v769 = vadd.f32 %v768, %v608
    %v770 = vadd.f32 %v769, %v611
    %v771 = vadd.f32 %v770, %v616
    %v772 = vadd.f32 %v771, %v619
    %v773 = vadd.f32 %v772, %v624
    %v774 = vadd.f32 %v773, %v627
    %v775 = vadd.f32 %v774, %v632
    %v776 = vadd.f32 %v775, %v635
    %v777 = vadd.f32 %v776, %v640
    %v778 = vadd.f32 %v777, %v643
    %v779 = vadd.f32 %v778, %v648
    %v780 = vadd.f32 %v779, %v651
    %v781 = vrot.slane %v780, 4
    %v782 = vadd.f32 %v780, %v781
    %v783 = vrot.slane %v782, 2
    %v784 = vadd.f32 %v782, %v783
    %v785 = vrot.slane %v784, 1
    %v786 = vadd.f32 %v784, %v785
    %v787 = vmul.f32 %v400, %v400
    %v788 = vmul.f32 %v403, %v403
    %v789 = vmul.f32 %v408, %v408
    %v790 = vmul.f32 %v411, %v411
    %v791 = vmul.f32 %v416, %v416
    %v792 = vmul.f32 %v419, %v419
    %v793 = vmul.f32 %v424, %v424
    %v794 = vmul.f32 %v427, %v427
    %v795 = vmul.f32 %v432, %v432
    %v796 = vmul.f32 %v435, %v435
    %v797 = vmul.f32 %v440, %v440
    %v798 = vmul.f32 %v443, %v443
    %v799 = vmul.f32 %v448, %v448
    %v800 = vmul.f32 %v451, %v451
    %v801 = vmul.f32 %v456, %v456
    %v802 = vmul.f32 %v459, %v459
    %v803 = vmul.f32 %v464, %v464
    %v804 = vmul.f32 %v467, %v467
    %v805 = vmul.f32 %v472, %v472
    %v806 = vmul.f32 %v475, %v475
    %v807 = vmul.f32 %v480, %v480
    %v808 = vmul.f32 %v483, %v483
    %v809 = vmul.f32 %v488, %v488
    %v810 = vmul.f32 %v491, %v491
    %v811 = vmul.f32 %v496, %v496
    %v812 = vmul.f32 %v499, %v499
    %v813 = vmul.f32 %v504, %v504
    %v814 = vmul.f32 %v507, %v507
    %v815 = vmul.f32 %v512, %v512
    %v816 = vmul.f32 %v515, %v515
    %v817 = vmul.f32 %v520, %v520
    %v818 = vmul.f32 %v523, %v523
    %v819 = vmul.f32 %v528, %v528
    %v820 = vmul.f32 %v531, %v531
    %v821 = vmul.f32 %v536, %v536
    %v822 = vmul.f32 %v539, %v539
    %v823 = vmul.f32 %v544, %v544
    %v824 = vmul.f32 %v547, %v547
    %v825 = vmul.f32 %v552, %v552
    %v826 = vmul.f32 %v555, %v555
    %v827 = vmul.f32 %v560, %v560
    %v828 = vmul.f32 %v563, %v563
    %v829 = vmul.f32 %v568, %v568
    %v830 = vmul.f32 %v571, %v571
    %v831 = vmul.f32 %v576, %v576
    %v832 = vmul.f32 %v579, %v579
    %v833 = vmul.f32 %v584, %v584
    %v834 = vmul.f32 %v587, %v587
    %v835 = vmul.f32 %v592, %v592
    %v836 = vmul.f32 %v595, %v595
    %v837 = vmul.f32 %v600, %v600
    %v838 = vmul.f32 %v603, %v603
    %v839 = vmul.f32 %v608, %v608
    %v840 = vmul.f32 %v611, %v611
    %v841 = vmul.f32 %v616, %v616
    %v842 = vmul.f32 %v619, %v619
    %v843 = vmul.f32 %v624, %v624
    %v844 = vmul.f32 %v627, %v627
    %v845 = vmul.f32 %v632, %v632
    %v846 = vmul.f32 %v635, %v635
    %v847 = vmul.f32 %v640, %v640
    %v848 = vmul.f32 %v643, %v643
    %v849 = vmul.f32 %v648, %v648
    %v850 = vmul.f32 %v651, %v651
    %v851 = vadd.f32 %v787, %v788
    %v852 = vadd.f32 %v851, %v789
    %v853 = vadd.f32 %v852, %v790
    %v854 = vadd.f32 %v853, %v791
    %v855 = vadd.f32 %v854, %v792
    %v856 = vadd.f32 %v855, %v793
    %v857 = vadd.f32 %v856, %v794
    %v858 = vadd.f32 %v857, %v795
    %v859 = vadd.f32 %v858, %v796
    %v860 = vadd.f32 %v859, %v797
    %v861 = vadd.f32 %v860, %v798
    %v862 = vadd.f32 %v861, %v799
    %v863 = vadd.f32 %v862, %v800
    %v864 = vadd.f32 %v863, %v801
    %v865 = vadd.f32 %v864, %v802
    %v866 = vadd.f32 %v865, %v803
    %v867 = vadd.f32 %v866, %v804
    %v868 = vadd.f32 %v867, %v805
    %v869 = vadd.f32 %v868, %v806
    %v870 = vadd.f32 %v869, %v807
    %v871 = vadd.f32 %v870, %v808
    %v872 = vadd.f32 %v871, %v809
    %v873 = vadd.f32 %v872, %v810
    %v874 = vadd.f32 %v873, %v811
    %v875 = vadd.f32 %v874, %v812
    %v876 = vadd.f32 %v875, %v813
    %v877 = vadd.f32 %v876, %v814
    %v878 = vadd.f32 %v877, %v815
    %v879 = vadd.f32 %v878, %v816
    %v880 = vadd.f32 %v879, %v817
    %v881 = vadd.f32 %v880, %v818
    %v882 = vadd.f32 %v881, %v819
    %v883 = vadd.f32 %v882, %v820
    %v884 = vadd.f32 %v883, %v821
    %v885 = vadd.f32 %v884, %v822
    %v886 = vadd.f32 %v885, %v823
    %v887 = vadd.f32 %v886, %v824
    %v888 = vadd.f32 %v887, %v825
    %v889 = vadd.f32 %v888, %v826
    %v890 = vadd.f32 %v889, %v827
    %v891 = vadd.f32 %v890, %v828
    %v892 = vadd.f32 %v891, %v829
    %v893 = vadd.f32 %v892, %v830
    %v894 = vadd.f32 %v893, %v831
    %v895 = vadd.f32 %v894, %v832
    %v896 = vadd.f32 %v895, %v833
    %v897 = vadd.f32 %v896, %v834
    %v898 = vadd.f32 %v897, %v835
    %v899 = vadd.f32 %v898, %v836
    %v900 = vadd.f32 %v899, %v837
    %v901 = vadd.f32 %v900, %v838
    %v902 = vadd.f32 %v901, %v839
    %v903 = vadd.f32 %v902, %v840
    %v904 = vadd.f32 %v903, %v841
    %v905 = vadd.f32 %v904, %v842
    %v906 = vadd.f32 %v905, %v843
    %v907 = vadd.f32 %v906, %v844
    %v908 = vadd.f32 %v907, %v845
    %v909 = vadd.f32 %v908, %v846
    %v910 = vadd.f32 %v909, %v847
    %v911 = vadd.f32 %v910, %v848
    %v912 = vadd.f32 %v911, %v849
    %v913 = vadd.f32 %v912, %v850
    %v914 = vrot.slane %v913, 4
    %v915 = vadd.f32 %v913, %v914
    %v916 = vrot.slane %v915, 2
    %v917 = vadd.f32 %v915, %v916
    %v918 = vrot.slane %v917, 1
    %v919 = vadd.f32 %v917, %v918
    %920 = vst [vmem:[#allocation8] sm:$0xff] %v786
    %921 = vst [vmem:[#allocation10] sm:$0xff] %v919
    // Predicated region
    $region18: #{tpu_custom_call.1} parent=1 // pred_check
      _
    $region19: #{tpu_custom_call.1} parent=1 // pred_check_branch
      %923 = sbr.rel (0) target = $region21
    $region20: #{tpu_custom_call.1} parent=1 // pred_region
      %s925 = ssub.s32 8192, 8192
      %926 = vsyncadd [#allocation4], %s925
      %s927 = sshll.u32 [#allocation7], 4
      %s928 = int_to_ptr.vmem [resolvable:$true] %s927
      %933 = dma.vmem_to_hbm [thread:$0]  %s928, 8192, %s2, [#allocation4], 128, 128, 8
    $region21: #{tpu_custom_call.1} parent=1 // pred_fallthru
      _
    // Predicated region
    $region22: #{tpu_custom_call.1} parent=1 // pred_check
      _
    $region23: #{tpu_custom_call.1} parent=1 // pred_check_branch
      %935 = sbr.rel (0) target = $region25
    $region24: #{tpu_custom_call.1} parent=1 // pred_region
      %s937 = ssub.s32 128, 128
      %938 = vsyncadd [#allocation9], %s937
      %s940 = sshll.u32 [#allocation8], 4
      %s941 = int_to_ptr.vmem [resolvable:$true] %s940
      %943 = dma.vmem_to_hbm [thread:$0]  %s941, 128, %s3, [#allocation9]
    $region25: #{tpu_custom_call.1} parent=1 // pred_fallthru
      _
    // Predicated region
    $region26: #{tpu_custom_call.1} parent=1 // pred_check
      _
    $region27: #{tpu_custom_call.1} parent=1 // pred_check_branch
      %945 = sbr.rel (0) target = $region29
    $region28: #{tpu_custom_call.1} parent=1 // pred_region
      %s947 = ssub.s32 128, 128
      %948 = vsyncadd [#allocation9], %s947
      %s950 = sshll.u32 [#allocation10], 4
      %s951 = int_to_ptr.vmem [resolvable:$true] %s950
      %953 = dma.vmem_to_hbm [thread:$0]  %s951, 128, %s4, [#allocation9]
    $region29: #{tpu_custom_call.1} parent=1 // pred_fallthru
      _
    // Predicated region
    $region30: #{tpu_custom_call.1} parent=1 // pred_check
      _
    $region31: #{tpu_custom_call.1} parent=1 // pred_check_branch
      %955 = sbr.rel (0) target = $region33
    $region32: #{tpu_custom_call.1} parent=1 // pred_region
      %956 = dma.done [#allocation4], 8192
    $region33: #{tpu_custom_call.1} parent=1 // pred_fallthru
      _
    // Predicated region
    $region34: #{tpu_custom_call.1} parent=1 // pred_check
      _
    $region35: #{tpu_custom_call.1} parent=1 // pred_check_branch
      %958 = sbr.rel (0) target = $region37
    $region36: #{tpu_custom_call.1} parent=1 // pred_region
      %959 = dma.done [#allocation9], 128
    $region37: #{tpu_custom_call.1} parent=1 // pred_fallthru
      _
    // Predicated region
    $region38: #{tpu_custom_call.1} parent=1 // pred_check
      _
    $region39: #{tpu_custom_call.1} parent=1 // pred_check_branch
      %961 = sbr.rel (0) target = $region41
    $region40: #{tpu_custom_call.1} parent=1 // pred_region
      %962 = dma.done [#allocation9], 128
    $region41: #{tpu_custom_call.1} parent=1 // pred_fallthru
      _
    %963 = vsyncpa [#allocation3], 1
    %964 = vsyncpa [#allocation6], 1
    %965 = vsyncpa [#allocation4], 1
    %966 = vsyncpa [#allocation9], 1

</llo_original>
